<compile_context>
chip_gen: v7x
topology: tpu7x:2x2x1
jax: 0.10.0
libtpu: 0.0.40
codegen_flags: <defaults>
</compile_context>

<pallas_src>
import numpy as np
import jax
import jax.numpy as jnp
from jax import lax
from jax.experimental import pallas as pl
from jax.experimental.pallas import tpu as pltpu


def _round_up(x, m):
    return (x + m - 1) // m * m


def _choose_tiling(dim, granule, max_tile):
    """Pick a tile size for `dim` that avoids padding whenever possible.

    Returns (tile, padded_dim).  Preference order:
      1. dim <= max_tile            -> one full-extent tile (a block equal to
                                       the full array dim needs no (8,128) pad),
      2. a granule-multiple divisor -> exact tiling, no padding,
      3. otherwise                  -> pad up to a multiple of the max tile.
    """
    if dim <= max_tile:
        return dim, dim
    t = (max_tile // granule) * granule
    while t >= granule:
        if dim % t == 0:
            return t, dim
        t -= granule
    t = (max_tile // granule) * granule
    return t, _round_up(dim, t)


def bow_kernel(x_ref, len_ref, emb_ref, out_ref, *scratch):
    """Grid point (i, j, k): batch tile i, hidden tile j, vocab-reduction step k."""
    j = pl.program_id(1)
    k = pl.program_id(2)
    tv = emb_ref.shape[0]

    @pl.when(k == 0)
    def _init():
        out_ref[...] = jnp.zeros_like(out_ref)

    def compute_counts():
        # counts[b, v] = #{ s : x[b, s] == k*tv + v } for this vocab tile.
        # Chunked over S: each step is one (tb, tv) int32 compare + f32 add,
        # so the working set is a few vregs (no (tb, S, tv) one-hot cube).
        idx = x_ref[...]                                         # (tb, S) int32
        tb, S = idx.shape
        iota = lax.broadcasted_iota(jnp.int32, (tb, tv), 1) + k * tv
        counts = jnp.zeros((tb, tv), jnp.float32)
        # TODO(synk): for long sequences (S >> 64) switch to a lax.fori_loop to
        # bound compile time; S is small for bag-of-words style inputs.
        for s in range(S):
            counts = counts + (idx[:, s:s + 1] == iota).astype(jnp.float32)
        return counts

    if scratch:
        # counts depend only on (i, k): compute at j == 0, reuse for all other
        # hidden tiles from a VMEM cache.
        counts_cache = scratch[0]

        @pl.when(j == 0)
        def _fill():
            counts_cache[k] = compute_counts()

        counts = counts_cache[k]
    else:
        counts = compute_counts()

    # Gather + seq-sum of embeddings for this vocab slice == counts @ table.
    # counts are small non-negative integers (<= S), exact in bf16 for S <= 256,
    # so casting to the table dtype keeps the MXU on its native-rate path while
    # preferred_element_type keeps the accumulation in f32.
    out_ref[...] += jnp.dot(counts.astype(emb_ref.dtype), emb_ref[...],
                            preferred_element_type=jnp.float32)

    @pl.when(k == pl.num_programs(2) - 1)
    def _finalize():
        # Divide by length fused into the epilogue.  length == 0 gives inf/NaN,
        # matching the PyTorch module's behaviour (no clamp).
        inv_len = pl.reciprocal(len_ref[...], approx=False)      # (tb, 1)
        out_ref[...] = out_ref[...] * inv_len


def bag_of_words(x, length, emb_table):
    """x: (B, S) int ids, length: (B,), emb_table: (V, H) -> (B, H) f32."""
    B, S = x.shape
    V, H = emb_table.shape

    # ---- tile sizes: lane-dense output, MXU-friendly operands -------------
    tb = min(_round_up(B, 8), 256)        # LHS M tile (sublane granule 8)
    tv, Vp = _choose_tiling(V, 128, 512)  # vocab reduction tile
    th, Hp = _choose_tiling(H, 128, 512)  # output lane tile
    Bp = _round_up(B, tb)

    n_i = Bp // tb
    # v7x has 2 TensorCores: when there is a single batch tile and H splits
    # cleanly, halve th so the parallel (i, j) grid has >= 2 tiles.
    if n_i == 1 and Hp == th and Hp % 256 == 0:
        th = Hp // 2
    n_j = Hp // th
    n_k = Vp // tv
    grid = (n_i, n_j, n_k)

    # ---- inputs ------------------------------------------------------------
    # Token ids / lengths are tiny; pad them to the batch tile (padded rows get
    # length 1.0 so padded lanes never produce NaN/inf).  The embedding table
    # is only copied if its shape is ragged w.r.t. the chosen tiles.
    x_p = jnp.zeros((Bp, S), dtype=jnp.int32).at[:B].set(x.astype(jnp.int32))
    len_p = jnp.ones((Bp, 1), dtype=jnp.float32).at[:B, 0].set(
        length.astype(jnp.float32))
    if (Vp, Hp) != (V, H):
        emb_in = jnp.zeros((Vp, Hp), dtype=emb_table.dtype).at[:V, :H].set(emb_table)
    else:
        emb_in = emb_table

    # Cache per-(i, k) counts across hidden tiles only when it saves work
    # (n_j > 1) and the cache is comfortably small.
    use_counts_cache = n_j > 1 and n_k * tb * tv * 4 <= 8 * 1024 * 1024
    scratch_shapes = (
        [pltpu.VMEM((n_k, tb, tv), jnp.float32)] if use_counts_cache else [])

    out_p = pl.pallas_call(
        bow_kernel,
        out_shape=jax.ShapeDtypeStruct((Bp, Hp), jnp.float32),
        grid_spec=pltpu.PrefetchScalarGridSpec(
            num_scalar_prefetch=0,
            grid=grid,
            in_specs=[
                pl.BlockSpec((tb, S), lambda i, j, k: (i, 0)),    # token ids
                pl.BlockSpec((tb, 1), lambda i, j, k: (i, 0)),    # lengths
                pl.BlockSpec((tv, th), lambda i, j, k: (k, j)),   # table tile
            ],
            out_specs=pl.BlockSpec((tb, th), lambda i, j, k: (i, j)),
            scratch_shapes=scratch_shapes,
        ),
        compiler_params=pltpu.CompilerParams(
            dimension_semantics=("parallel", "parallel", "arbitrary")),
    )(x_p, len_p, emb_in)

    return out_p[:B, :H]


if __name__ == "__main__":
    # Small shapes implied by the forward: batch=2, seq=8, vocab=64, hidden=32.
    B, S, V, H = 2, 8, 64, 32
    PAD_IDX = 0

    key = jax.random.PRNGKey(0)
    k_emb, k_idx = jax.random.split(key)

    # nn.Embedding weight with padding_idx row zeroed (as at PyTorch init).
    emb_table = jax.random.normal(k_emb, (V, H), dtype=jnp.float32) * 0.1
    emb_table = emb_table.at[PAD_IDX].set(0.0)

    # Token ids in [1, V); positions past `length` set to PAD_IDX.
    lengths = jnp.array([8, 5], dtype=jnp.int32)
    x = jax.random.randint(k_idx, (B, S), 1, V, dtype=jnp.int32)
    pos = jnp.arange(S)[None, :]
    x = jnp.where(pos < lengths[:, None], x, PAD_IDX)

    out = jax.block_until_ready(bag_of_words(x, lengths, emb_table))

    # Pure-numpy reference: emb(x).sum(1) / length.unsqueeze(1).float()
    emb_np = np.asarray(emb_table)
    ref = emb_np[np.asarray(x)].sum(axis=1) / np.asarray(lengths, np.float32)[:, None]

    assert out.shape == (B, H)
    np.testing.assert_allclose(np.asarray(out), ref, rtol=1e-5, atol=1e-5)
    print("KERNEL_OK")
</pallas_src>

<mosaic_0001>
module attributes {stable_mosaic.version = 11 : i64} {
  func.func @bow_kernel(%arg0: i32, %arg1: i32, %arg2: i32, %arg3: memref<8x8xi32, #tpu.memory_space<vmem>>, %arg4: memref<8x1xf32, #tpu.memory_space<vmem>>, %arg5: memref<64x32xf32, #tpu.memory_space<vmem>>, %arg6: memref<8x32xf32, #tpu.memory_space<vmem>>) attributes {dimension_semantics = [#tpu.dimension_semantics<parallel>, #tpu.dimension_semantics<parallel>, #tpu.dimension_semantics<arbitrary>], iteration_bounds = array<i64: 1, 1, 1>, scalar_prefetch = 0 : i64, scratch_operands = 0 : i64, tpu.core_type = #tpu.core_type<tc>, window_params = [{transform_indices = @transform_0, window_bounds = array<i64: 8, 8>}, {transform_indices = @transform_1, window_bounds = array<i64: 8, 1>}, {transform_indices = @transform_2, window_bounds = array<i64: 64, 32>}, {transform_indices = @transform_3, window_bounds = array<i64: 8, 32>}]} {
    %c0_i32 = arith.constant 0 : i32
    %0 = arith.cmpi eq, %arg2, %c0_i32 : i32
    %1 = arith.extui %0 : i1 to i32
    %c0_i32_0 = arith.constant 0 : i32
    %2 = arith.cmpi ne, %1, %c0_i32_0 : i32
    scf.if %2 {
      %cst_11 = arith.constant 0.000000e+00 : f32
      %65 = vector.broadcast %cst_11 : f32 to vector<8x32xf32>
      %c0_12 = arith.constant 0 : index
      %c0_13 = arith.constant 0 : index
      %66 = vector.load %arg6[%c0_12, %c0_13] : memref<8x32xf32, #tpu.memory_space<vmem>>, vector<8x32xf32>
      tpu.vector_store %arg6[%c0_12, %c0_13], %65 {strides = array<i32>} : memref<8x32xf32, #tpu.memory_space<vmem>>, vector<8x32xf32>,
    } else {
    }
    %c0 = arith.constant 0 : index
    %c0_1 = arith.constant 0 : index
    %3 = vector.load %arg3[%c0, %c0_1] : memref<8x8xi32, #tpu.memory_space<vmem>>, vector<8x8xi32>
    %4 = tpu.iota {dimensions = array<i32: 1>} : vector<8x64xi32>
    %c64_i32 = arith.constant 64 : i32
    %5 = arith.muli %arg2, %c64_i32 : i32
    %6 = vector.broadcast %5 : i32 to vector<8x64xi32>
    %7 = arith.addi %4, %6 : vector<8x64xi32>
    %cst = arith.constant 0.000000e+00 : f32
    %8 = vector.broadcast %cst : f32 to vector<8x64xf32>
    %9 = vector.extract_strided_slice %3 {offsets = [0, 0], sizes = [8, 1], strides = [1, 1]} : vector<8x8xi32> to vector<8x1xi32>
    %10 = vector.broadcast %9 : vector<8x1xi32> to vector<8x64xi32>
    %11 = arith.cmpi eq, %10, %7 : vector<8x64xi32>
    %12 = arith.extui %11 : vector<8x64xi1> to vector<8x64xi32>
    %13 = arith.sitofp %12 : vector<8x64xi32> to vector<8x64xf32>
    %14 = arith.addf %8, %13 : vector<8x64xf32>
    %15 = vector.extract_strided_slice %3 {offsets = [0, 1], sizes = [8, 1], strides = [1, 1]} : vector<8x8xi32> to vector<8x1xi32>
    %16 = vector.broadcast %15 : vector<8x1xi32> to vector<8x64xi32>
    %17 = arith.cmpi eq, %16, %7 : vector<8x64xi32>
    %18 = arith.extui %17 : vector<8x64xi1> to vector<8x64xi32>
    %19 = arith.sitofp %18 : vector<8x64xi32> to vector<8x64xf32>
    %20 = arith.addf %14, %19 : vector<8x64xf32>
    %21 = vector.extract_strided_slice %3 {offsets = [0, 2], sizes = [8, 1], strides = [1, 1]} : vector<8x8xi32> to vector<8x1xi32>
    %22 = vector.broadcast %21 : vector<8x1xi32> to vector<8x64xi32>
    %23 = arith.cmpi eq, %22, %7 : vector<8x64xi32>
    %24 = arith.extui %23 : vector<8x64xi1> to vector<8x64xi32>
    %25 = arith.sitofp %24 : vector<8x64xi32> to vector<8x64xf32>
    %26 = arith.addf %20, %25 : vector<8x64xf32>
    %27 = vector.extract_strided_slice %3 {offsets = [0, 3], sizes = [8, 1], strides = [1, 1]} : vector<8x8xi32> to vector<8x1xi32>
    %28 = vector.broadcast %27 : vector<8x1xi32> to vector<8x64xi32>
    %29 = arith.cmpi eq, %28, %7 : vector<8x64xi32>
    %30 = arith.extui %29 : vector<8x64xi1> to vector<8x64xi32>
    %31 = arith.sitofp %30 : vector<8x64xi32> to vector<8x64xf32>
    %32 = arith.addf %26, %31 : vector<8x64xf32>
    %33 = vector.extract_strided_slice %3 {offsets = [0, 4], sizes = [8, 1], strides = [1, 1]} : vector<8x8xi32> to vector<8x1xi32>
    %34 = vector.broadcast %33 : vector<8x1xi32> to vector<8x64xi32>
    %35 = arith.cmpi eq, %34, %7 : vector<8x64xi32>
    %36 = arith.extui %35 : vector<8x64xi1> to vector<8x64xi32>
    %37 = arith.sitofp %36 : vector<8x64xi32> to vector<8x64xf32>
    %38 = arith.addf %32, %37 : vector<8x64xf32>
    %39 = vector.extract_strided_slice %3 {offsets = [0, 5], sizes = [8, 1], strides = [1, 1]} : vector<8x8xi32> to vector<8x1xi32>
    %40 = vector.broadcast %39 : vector<8x1xi32> to vector<8x64xi32>
    %41 = arith.cmpi eq, %40, %7 : vector<8x64xi32>
    %42 = arith.extui %41 : vector<8x64xi1> to vector<8x64xi32>
    %43 = arith.sitofp %42 : vector<8x64xi32> to vector<8x64xf32>
    %44 = arith.addf %38, %43 : vector<8x64xf32>
    %45 = vector.extract_strided_slice %3 {offsets = [0, 6], sizes = [8, 1], strides = [1, 1]} : vector<8x8xi32> to vector<8x1xi32>
    %46 = vector.broadcast %45 : vector<8x1xi32> to vector<8x64xi32>
    %47 = arith.cmpi eq, %46, %7 : vector<8x64xi32>
    %48 = arith.extui %47 : vector<8x64xi1> to vector<8x64xi32>
    %49 = arith.sitofp %48 : vector<8x64xi32> to vector<8x64xf32>
    %50 = arith.addf %44, %49 : vector<8x64xf32>
    %51 = vector.extract_strided_slice %3 {offsets = [0, 7], sizes = [8, 1], strides = [1, 1]} : vector<8x8xi32> to vector<8x1xi32>
    %52 = vector.broadcast %51 : vector<8x1xi32> to vector<8x64xi32>
    %53 = arith.cmpi eq, %52, %7 : vector<8x64xi32>
    %54 = arith.extui %53 : vector<8x64xi1> to vector<8x64xi32>
    %55 = arith.sitofp %54 : vector<8x64xi32> to vector<8x64xf32>
    %56 = arith.addf %50, %55 : vector<8x64xf32>
    %c0_2 = arith.constant 0 : index
    %c0_3 = arith.constant 0 : index
    %57 = vector.load %arg6[%c0_2, %c0_3] : memref<8x32xf32, #tpu.memory_space<vmem>>, vector<8x32xf32>
    %c0_4 = arith.constant 0 : index
    %c0_5 = arith.constant 0 : index
    %58 = vector.load %arg5[%c0_4, %c0_5] : memref<64x32xf32, #tpu.memory_space<vmem>>, vector<64x32xf32>
    %cst_6 = arith.constant dense<0.000000e+00> : vector<8x32xf32>
    %59 = tpu.matmul %56, %58, %cst_6 {dimension_numbers = #tpu.dot_dimension_numbers<[1], [0], [0], [1], [0, 0, 1, 1], [], []>} : vector<8x64xf32>, vector<64x32xf32>, vector<8x32xf32> -> vector<8x32xf32>
    %60 = arith.addf %57, %59 : vector<8x32xf32>
    %c0_7 = arith.constant 0 : index
    %c0_8 = arith.constant 0 : index
    %61 = vector.load %arg6[%c0_7, %c0_8] : memref<8x32xf32, #tpu.memory_space<vmem>>, vector<8x32xf32>
    tpu.vector_store %arg6[%c0_7, %c0_8], %60 {strides = array<i32>} : memref<8x32xf32, #tpu.memory_space<vmem>>, vector<8x32xf32>,
    %c0_i32_9 = arith.constant 0 : i32
    %62 = arith.cmpi eq, %arg2, %c0_i32_9 : i32
    %63 = arith.extui %62 : i1 to i32
    %c0_i32_10 = arith.constant 0 : i32
    %64 = arith.cmpi ne, %63, %c0_i32_10 : i32
    scf.if %64 {
      %c0_11 = arith.constant 0 : index
      %c0_12 = arith.constant 0 : index
      %65 = vector.load %arg4[%c0_11, %c0_12] : memref<8x1xf32, #tpu.memory_space<vmem>>, vector<8x1xf32>
      %66 = tpu.reciprocal %65 : vector<8x1xf32> -> vector<8x1xf32>
      %c0_13 = arith.constant 0 : index
      %c0_14 = arith.constant 0 : index
      %67 = vector.load %arg6[%c0_13, %c0_14] : memref<8x32xf32, #tpu.memory_space<vmem>>, vector<8x32xf32>
      %68 = vector.broadcast %66 : vector<8x1xf32> to vector<8x32xf32>
      %69 = arith.mulf %67, %68 : vector<8x32xf32>
      %c0_15 = arith.constant 0 : index
      %c0_16 = arith.constant 0 : index
      %70 = vector.load %arg6[%c0_15, %c0_16] : memref<8x32xf32, #tpu.memory_space<vmem>>, vector<8x32xf32>
      tpu.vector_store %arg6[%c0_15, %c0_16], %69 {strides = array<i32>} : memref<8x32xf32, #tpu.memory_space<vmem>>, vector<8x32xf32>,
    } else {
    }
    return
  }
  func.func @transform_0(%arg0: i32, %arg1: i32, %arg2: i32) -> (i32, i32) {
    %c0_i32 = arith.constant 0 : i32
    %c0_i32_0 = arith.constant 0 : i32
    return %arg0, %c0_i32 : i32, i32
  }
  func.func @transform_1(%arg0: i32, %arg1: i32, %arg2: i32) -> (i32, i32) {
    %c0_i32 = arith.constant 0 : i32
    %c0_i32_0 = arith.constant 0 : i32
    return %arg0, %c0_i32 : i32, i32
  }
  func.func @transform_2(%arg0: i32, %arg1: i32, %arg2: i32) -> (i32, i32) {
    %c0_i32 = arith.constant 0 : i32
    return %arg2, %arg1 : i32, i32
  }
  func.func @transform_3(%arg0: i32, %arg1: i32, %arg2: i32) -> (i32, i32) {
    %c0_i32 = arith.constant 0 : i32
    return %arg0, %arg1 : i32, i32
  }
}

</mosaic_0001>

<llo_original>
// kernel: tpu_custom_call.1
$region0: #{tpu_custom_call.1}
  #allocation0 [shape = 'u32[]', space=smem, size = 0x4, offset = 0x4, fixed_abs, tag = 'smem constant byte address 0x4 - core index']
  #allocation1 [shape = 'u32[144,128]{1,0:T(1,128)}', space=vmem, size = 0x12000, scoped, tag = 'internal scratch']
  %s0 = inlined_call_operand.vmem [shape: s32[8,8], index: 0, kind: input, shape index: {}]
  %s1 = inlined_call_operand.vmem [shape: f32[8,1], index: 1, kind: input, shape index: {}]
  %s2 = inlined_call_operand.vmem [shape: f32[64,32], index: 2, kind: input, shape index: {}]
  %s3 = inlined_call_operand.hbm [shape: f32[8,32], index: 3, kind: output, shape index: {}]
  %s4 = sld [smem:[#allocation0]]
  $region30: #{tpu_custom_call.1} parent=0
    _
  %s6 = ssub.s32 1, %s4
  %s7 = scalar_select 0, %s6, %s4
  $region1: #{tpu_custom_call.1} parent=0
    #allocation2 [shape = 'u8[4096]{0}', space=vmem, size = 0x1000, scoped, tag = 'output window, operand 0, single buffered']
    #allocation3 [shape = 's32[1]{0}', space=sflag, size = 0x4, scoped, tag = 'scoped memory for tpu_custom_call.1']
    %8 = vsyncpa [#allocation3], 0
    // Predicated region
    $region2: #{tpu_custom_call.1} parent=1 // pred_check
      _
    $region3: #{tpu_custom_call.1} parent=1 // pred_check_branch
      %10 = sbr.rel (0) target = $region5
    $region4: #{tpu_custom_call.1} parent=1 // pred_region
      _
    $region5: #{tpu_custom_call.1} parent=1 // pred_fallthru
      _
    // Predicated region
    $region6: #{tpu_custom_call.1} parent=1 // pred_check
      _
    $region7: #{tpu_custom_call.1} parent=1 // pred_check_branch
      %12 = sbr.rel (0) target = $region9
    $region8: #{tpu_custom_call.1} parent=1 // pred_region
      _
    $region9: #{tpu_custom_call.1} parent=1 // pred_fallthru
      _
    // Predicated region
    $region10: #{tpu_custom_call.1} parent=1 // pred_check
      _
    $region11: #{tpu_custom_call.1} parent=1 // pred_check_branch
      %14 = sbr.rel (0) target = $region13
    $region12: #{tpu_custom_call.1} parent=1 // pred_region
      _
    $region13: #{tpu_custom_call.1} parent=1 // pred_fallthru
      _
    %p15 = scmp.eq.s32.totalorder 0, 0
    // Predicated region
    $region14: #{tpu_custom_call.1} parent=1 // pred_check
      %p16 = pneg %p15
    $region15: #{tpu_custom_call.1} parent=1 // pred_check_branch
      %18 = sbr.rel (%p16) target = $region17
    $region16: #{tpu_custom_call.1} parent=1 // pred_region
      %vm19 = vcmask 261120
      %20 = vst.msk [vmem:[#allocation2] sm:$0xff] %vm19, 0.0
    $region17: #{tpu_custom_call.1} parent=1 // pred_fallthru
      _
    %v21 = vld [vmem:[%s0] sm:$0xff]
    %v22 = vlaneseq
    %v23 = vand.u32 %v22, 127
    %s24 = smul.u32 0, 64
    %v25 = vstv %s24
    %v26 = vadd.s32 %v23, %v25
    %27 = vset.pattern.permute.xlu0 0
    %28 = vperm.xlu0 %27, %v21
    %v29 = vpop.permute.xlu0 %28
    %vm30 = vcmp.eq.s32.totalorder %v29, %v26
    %v31 = vsel %vm30, 1, 0
    %v32 = vcvt.s32.f32 %v31
    %v33 = vadd.f32 %v32, 0.0
    %34 = vset.pattern.permute.xlu0 1
    %35 = vperm.xlu0 %34, %v21
    %v36 = vpop.permute.xlu0 %35
    %vm37 = vcmp.eq.s32.totalorder %v36, %v26
    %v38 = vsel %vm37, 1, 0
    %v39 = vcvt.s32.f32 %v38
    %v40 = vadd.f32 %v33, %v39
    %41 = vset.pattern.permute.xlu0 2
    %42 = vperm.xlu0 %41, %v21
    %v43 = vpop.permute.xlu0 %42
    %vm44 = vcmp.eq.s32.totalorder %v43, %v26
    %v45 = vsel %vm44, 1, 0
    %v46 = vcvt.s32.f32 %v45
    %v47 = vadd.f32 %v40, %v46
    %48 = vset.pattern.permute.xlu0 3
    %49 = vperm.xlu0 %48, %v21
    %v50 = vpop.permute.xlu0 %49
    %vm51 = vcmp.eq.s32.totalorder %v50, %v26
    %v52 = vsel %vm51, 1, 0
    %v53 = vcvt.s32.f32 %v52
    %v54 = vadd.f32 %v47, %v53
    %55 = vset.pattern.permute.xlu0 4
    %56 = vperm.xlu0 %55, %v21
    %v57 = vpop.permute.xlu0 %56
    %vm58 = vcmp.eq.s32.totalorder %v57, %v26
    %v59 = vsel %vm58, 1, 0
    %v60 = vcvt.s32.f32 %v59
    %v61 = vadd.f32 %v54, %v60
    %62 = vset.pattern.permute.xlu0 5
    %63 = vperm.xlu0 %62, %v21
    %v64 = vpop.permute.xlu0 %63
    %vm65 = vcmp.eq.s32.totalorder %v64, %v26
    %v66 = vsel %vm65, 1, 0
    %v67 = vcvt.s32.f32 %v66
    %v68 = vadd.f32 %v61, %v67
    %69 = vset.pattern.permute.xlu0 6
    %70 = vperm.xlu0 %69, %v21
    %v71 = vpop.permute.xlu0 %70
    %vm72 = vcmp.eq.s32.totalorder %v71, %v26
    %v73 = vsel %vm72, 1, 0
    %v74 = vcvt.s32.f32 %v73
    %v75 = vadd.f32 %v68, %v74
    %76 = vset.pattern.permute.xlu0 7
    %77 = vperm.xlu0 %76, %v21
    %v78 = vpop.permute.xlu0 %77
    %vm79 = vcmp.eq.s32.totalorder %v78, %v26
    %v80 = vsel %vm79, 1, 0
    %v81 = vcvt.s32.f32 %v80
    %v82 = vadd.f32 %v75, %v81
    %v83 = vld [vmem:[#allocation2] sm:$0xff]
    %v84 = vld [vmem:[%s2] sm:$0xff]
    %v85 = vld [vmem:[%s2 + $0x8] sm:$0xff]
    %v86 = vld [vmem:[%s2 + $0x10] sm:$0xff]
    %v87 = vld [vmem:[%s2 + $0x18] sm:$0xff]
    %v88 = vld [vmem:[%s2 + $0x20] sm:$0xff]
    %v89 = vld [vmem:[%s2 + $0x28] sm:$0xff]
    %v90 = vld [vmem:[%s2 + $0x30] sm:$0xff]
    %v91 = vld [vmem:[%s2 + $0x38] sm:$0xff]
    %vm92 = vcmask 523264
    %v94 = vsel %vm92, %v82, 0
    %96 = vmatprep.subr.mxu0 0.0
    %97 = vmatpush1.msra.mxu0 %v84
    %98 = vmatprep.subr.mxu0 0.0
    %99 = vmatpush1.msra.mxu0 %v85
    %100 = vmatprep.subr.mxu0 0.0
    %101 = vmatpush1.msra.mxu0 %v86
    %102 = vmatprep.subr.mxu0 0.0
    %103 = vmatpush1.msra.mxu0 %v87
    %104 = vmatprep.subr.mxu0 0.0
    %105 = vmatpush1.msra.mxu0 %v88
    %106 = vmatprep.subr.mxu0 0.0
    %107 = vmatpush1.msra.mxu0 %v89
    %108 = vmatprep.subr.mxu0 0.0
    %109 = vmatpush1.msra.mxu0 %v90
    %110 = vmatprep.subr.mxu0 0.0
    %111 = vmatpush1.msra.mxu0 %v91
    %112 = vmatprep.subr.mxu0 0.0
    %113 = vmatpush1.msra.mxu0 0.0
    %114 = vmatprep.subr.mxu0 0.0
    %115 = vmatpush1.msra.mxu0 0.0
    %116 = vmatprep.subr.mxu0 0.0
    %117 = vmatpush1.msra.mxu0 0.0
    %118 = vmatprep.subr.mxu0 0.0
    %119 = vmatpush1.msra.mxu0 0.0
    %120 = vmatprep.subr.mxu0 0.0
    %121 = vmatpush1.msra.mxu0 0.0
    %122 = vmatprep.subr.mxu0 0.0
    %123 = vmatpush1.msra.mxu0 0.0
    %124 = vmatprep.subr.mxu0 0.0
    %125 = vmatpush1.msra.mxu0 0.0
    %126 = vmatprep.subr.mxu0 0.0
    %127 = vmatpush1.msra.mxu0 0.0
    %128 = vmatprep.subr.mxu0 0.0
    %129 = vmatpush1.msra.mxu0 0.0
    %130 = vmatprep.subr.mxu0 0.0
    %131 = vmatpush1.msra.mxu0 0.0
    %132 = vmatprep.subr.mxu0 0.0
    %133 = vmatpush1.msra.mxu0 0.0
    %134 = vmatprep.subr.mxu0 0.0
    %135 = vmatpush1.msra.mxu0 0.0
    %136 = vmatprep.subr.mxu0 0.0
    %137 = vmatpush1.msra.mxu0 0.0
    %138 = vmatprep.subr.mxu0 0.0
    %139 = vmatpush1.msra.mxu0 0.0
    %140 = vmatprep.subr.mxu0 0.0
    %141 = vmatpush1.msra.mxu0 0.0
    %142 = vmatprep.subr.mxu0 0.0
    %143 = vmatpush1.msra.mxu0 0.0
    %144 = vmatprep.subr.mxu0 0.0
    %145 = vmatpush1.msra.mxu0 0.0
    %146 = vmatprep.subr.mxu0 0.0
    %147 = vmatpush1.msra.mxu0 0.0
    %148 = vmatprep.subr.mxu0 0.0
    %149 = vmatpush1.msra.mxu0 0.0
    %150 = vmatprep.subr.mxu0 0.0
    %151 = vmatpush1.msra.mxu0 0.0
    %152 = vmatprep.subr.mxu0 0.0
    %153 = vmatpush1.msra.mxu0 0.0
    %154 = vmatprep.subr.mxu0 0.0
    %155 = vmatpush1.msra.mxu0 0.0
    %156 = vmatprep.subr.mxu0 0.0
    %157 = vmatpush1.msra.mxu0 0.0
    %158 = vmatprep.subr.mxu0 0.0
    %159 = vmatpush1.msra.mxu0 0.0
    %160 = vmatprep.mubr.f32.mxu0 0.0
    %161 = vmatmul.mubr.f32.gmra.mrb[0].mxu0 %v94
    %v162 = vpop.f32.mrb[0].mxu0
    %v163 = vadd.f32 0.0, %v162
    %v164 = vpop.f32.mrb[0].mxu0
    %165 = vdwg.mxu0
    %v166 = vadd.f32 %v83, %v163
    %vm167 = vcmask 261120
    %168 = vst.msk [vmem:[#allocation2] sm:$0xff] %vm167, %v166
    // Predicated region
    $region18: #{tpu_custom_call.1} parent=1 // pred_check
      %p169 = pneg %p15
    $region19: #{tpu_custom_call.1} parent=1 // pred_check_branch
      %171 = sbr.rel (%p169) target = $region21
    $region20: #{tpu_custom_call.1} parent=1 // pred_region
      %v172 = vld [vmem:[%s1] sm:$0xff]
      %v173 = vrcp.pop %v172
      %v174 = vld [vmem:[#allocation2] sm:$0xff]
      %176 = vset.pattern.permute.xlu0 0
      %177 = vperm.xlu0 %176, %v173
      %v178 = vpop.permute.xlu0 %177
      %v180 = vmul.f32 %v174, %v178
      %181 = vst.msk [vmem:[#allocation2] sm:$0xff] %vm167, %v180
    $region21: #{tpu_custom_call.1} parent=1 // pred_fallthru
      _
    // Predicated region
    $region22: #{tpu_custom_call.1} parent=1 // pred_check
      _
    $region23: #{tpu_custom_call.1} parent=1 // pred_check_branch
      %183 = sbr.rel (0) target = $region25
    $region24: #{tpu_custom_call.1} parent=1 // pred_region
      %s185 = ssub.s32 128, 128
      %186 = vsyncadd [#allocation3], %s185
      %s188 = sshll.u32 [#allocation2], 4
      %s189 = int_to_ptr.vmem [resolvable:$true] %s188
      %191 = dma.vmem_to_hbm [thread:$0]  %s189, 128, %s3, [#allocation3]
    $region25: #{tpu_custom_call.1} parent=1 // pred_fallthru
      _
    // Predicated region
    $region26: #{tpu_custom_call.1} parent=1 // pred_check
      _
    $region27: #{tpu_custom_call.1} parent=1 // pred_check_branch
      %193 = sbr.rel (0) target = $region29
    $region28: #{tpu_custom_call.1} parent=1 // pred_region
      %194 = dma.done [#allocation3], 128
    $region29: #{tpu_custom_call.1} parent=1 // pred_fallthru
      _
    %195 = vsyncpa [#allocation3], 1

</llo_original>
